<compile_context>
chip_gen: v7x
topology: tpu7x:2x2x1
jax: 0.10.0
libtpu: 0.0.40
codegen_flags: <defaults>
</compile_context>

<pallas_src>
import math
import functools

import numpy as np
import jax
import jax.numpy as jnp
from jax.experimental import pallas as pl
from jax.experimental import pallas as _pl_unused  # noqa: F401 (keep import form stable)
from jax.experimental.pallas import tpu as pltpu


EMB_PAD = 128   # lane-dense padded embedding width (>= emb_dim)


# ----------------------------- fused Pallas kernel ---------------------------

def _frame_selector_kernel(x_img_ref, w_img_ref, x_txt_ref, w_txt_ref,
                           img_out_ref, txt_out_ref, f2f_ref, f2t_ref,
                           acc_ref):
    """Fused encoder + cosine-similarity kernel.

    Grid axis 0 tiles the image feature dim K ("arbitrary"/reduction axis).
    acc_ref is a (F_pad, EMB_PAD) f32 VMEM accumulator (P3 init/finalize).
    """
    k = pl.program_id(0)

    @pl.when(k == 0)
    def _init():
        acc_ref[...] = jnp.zeros_like(acc_ref)

    # Image encoder: bf16 inputs, f32 MXU accumulation, K-tiled.
    acc_ref[...] += jnp.dot(x_img_ref[...], w_img_ref[...],
                            preferred_element_type=jnp.float32)

    @pl.when(k == pl.num_programs(0) - 1)
    def _finalize():
        img = acc_ref[...]                                   # (F_pad, 128) f32
        # Text encoder (single tiny row) — computed once, on the last step.
        txt = jnp.dot(x_txt_ref[...], w_txt_ref[...],
                      preferred_element_type=jnp.float32)    # (1, 128) f32

        # Direct full-tile stores (no concatenate, no intermediate slab).
        img_out_ref[...] = img
        txt_out_ref[...] = txt

        # L2-normalize once, reuse for both score computations.
        img_n = img * jax.lax.rsqrt(
            jnp.sum(img * img, axis=-1, keepdims=True) + 1e-12)
        txt_n = txt * jax.lax.rsqrt(
            jnp.sum(txt * txt, axis=-1, keepdims=True) + 1e-12)

        # f2f: transposed-RHS matmul against the real rows only (no explicit
        # .T through the XLU, no zero-padded dead columns on the MXU).
        f2f_ref[...] = jax.lax.dot_general(
            img_n, img_n,
            dimension_numbers=(((1,), (1,)), ((), ())),
            preferred_element_type=jnp.float32)              # (F_pad, F_pad)

        # f2t: broadcast-multiply + row reduce (cheaper than a degenerate
        # N=1 MXU matmul).
        f2t_ref[...] = jnp.sum(img_n * txt_n, axis=-1, keepdims=True)


def fused_encode_and_score(x_img, w_img, x_txt, w_txt, *, tk):
    """One pallas_call computing embeddings + both cosine-similarity scores.

    x_img : (F_pad, K_img_pad) bf16   (K_img_pad % tk == 0, F_pad % 8 == 0)
    w_img : (K_img_pad, EMB_PAD) bf16
    x_txt : (1, K_txt) bf16           (single real text row, no F padding)
    w_txt : (K_txt, EMB_PAD) bf16

    Returns:
      img_embs : (F_pad, EMB_PAD) f32
      txt_embs : (1, EMB_PAD)     f32
      f2f      : (F_pad, F_pad)   f32
      f2t      : (F_pad, 1)       f32
    """
    fp, k_img = x_img.shape
    k_txt = x_txt.shape[1]
    assert k_img % tk == 0 and fp % 8 == 0
    n_k = k_img // tk

    return pl.pallas_call(
        _frame_selector_kernel,
        out_shape=(
            jax.ShapeDtypeStruct((fp, EMB_PAD), jnp.float32),
            jax.ShapeDtypeStruct((1, EMB_PAD), jnp.float32),
            jax.ShapeDtypeStruct((fp, fp), jnp.float32),
            jax.ShapeDtypeStruct((fp, 1), jnp.float32),
        ),
        grid_spec=pltpu.PrefetchScalarGridSpec(
            num_scalar_prefetch=0,
            grid=(n_k,),
            in_specs=[
                pl.BlockSpec((fp, tk), lambda k: (0, k)),         # x_img K-tile
                pl.BlockSpec((tk, EMB_PAD), lambda k: (k, 0)),    # w_img K-tile
                pl.BlockSpec((1, k_txt), lambda k: (0, 0)),       # x_txt resident
                pl.BlockSpec((k_txt, EMB_PAD), lambda k: (0, 0)), # w_txt resident
            ],
            out_specs=(
                pl.BlockSpec((fp, EMB_PAD), lambda k: (0, 0)),
                pl.BlockSpec((1, EMB_PAD), lambda k: (0, 0)),
                pl.BlockSpec((fp, fp), lambda k: (0, 0)),
                pl.BlockSpec((fp, 1), lambda k: (0, 0)),
            ),
            scratch_shapes=[pltpu.VMEM((fp, EMB_PAD), jnp.float32)],
        ),
        compiler_params=pltpu.CompilerParams(
            dimension_semantics=("arbitrary",)),
    )(x_img, w_img, x_txt, w_txt)


# ------------------------- SeqFrameSelector (JAX) ----------------------------

class SeqFrameSelector:
    def __init__(self, config, img_feat_dim, txt_feat_dim, emb_dim=32):
        assert emb_dim <= EMB_PAD
        self.f2f_thrd = config.get('f2f_thrd', 0.85)
        self.f2t_thrd = config.get('f2t_thrd', -1)
        self.max_frame_num = config.get('max_frame_num', 32)
        self.emb_dim = emb_dim
        self.img_feat_dim = img_feat_dim

        # Pad the image feature dim to a multiple of 128 so the K grid axis
        # tiles cleanly; pick the largest K-tile from {512, 256, 128}.
        self.k_img_pad = pl.cdiv(img_feat_dim, 128) * 128
        for cand in (512, 256, 128):
            if self.k_img_pad % cand == 0:
                self.tk = cand
                break

        # Deterministic "CLIP" projection weights (synthetic, not a checkpoint),
        # zero-padded to (K_pad, 128) / (K_txt, 128) and stored as bf16
        # (MXU-native inputs; f32 accumulation happens in-kernel).
        k_img, k_txt = jax.random.split(jax.random.PRNGKey(42))
        w_img = (jax.random.normal(k_img, (img_feat_dim, emb_dim), jnp.float32)
                 / np.sqrt(img_feat_dim))
        w_txt = (jax.random.normal(k_txt, (txt_feat_dim, emb_dim), jnp.float32)
                 / np.sqrt(txt_feat_dim))
        self.w_img = jnp.pad(
            w_img,
            ((0, self.k_img_pad - img_feat_dim), (0, EMB_PAD - emb_dim)),
        ).astype(jnp.bfloat16)
        self.w_txt = jnp.pad(
            w_txt, ((0, 0), (0, EMB_PAD - emb_dim))).astype(jnp.bfloat16)

        # Single jitted executable for ALL device-side work in process():
        # reshape / casts / pads / pallas_call / output slices fuse into one
        # dispatch (this workload is launch-bound).
        self._process_jit = jax.jit(self._process_device)

    # ---- all device-side work (traced once under jax.jit) -------------------
    def _process_device(self, image_inputs, text_inputs):
        f = image_inputs.shape[0]
        fp = ((f + 7) // 8) * 8                       # sublane-aligned frame count

        x_img = image_inputs.reshape(f, -1).astype(jnp.bfloat16)
        x_img = jnp.pad(
            x_img, ((0, fp - f), (0, self.k_img_pad - x_img.shape[1])))
        # Single real text row — NOT padded to F rows.
        x_txt = text_inputs.astype(jnp.bfloat16)      # (1, K_txt)

        img_full, txt_full, f2f_full, f2t_full = fused_encode_and_score(
            x_img, self.w_img, x_txt, self.w_txt, tk=self.tk)

        img_embs = img_full[:f, : self.emb_dim]
        text_embs = txt_full[:, : self.emb_dim]
        f2f_scores = f2f_full[:f, :f]
        f2t_scores = f2t_full[:f, 0]
        return img_embs, text_embs, f2f_scores, f2t_scores

    # ---- process: embeddings + cosine similarity matrices (one dispatch) ----
    def process(self, image_inputs, text_inputs):
        return self._process_jit(image_inputs, text_inputs)

    # ---- forward: greedy selection (sequential, host-side) ------------------
    def forward(self, image_inputs, text_inputs):
        img_embs, text_embs, f2f_scores, f2t_scores = self.process(
            image_inputs, text_inputs)

        f2f_np, f2t_np = jax.device_get((f2f_scores, f2t_scores))
        f2f_np = np.asarray(f2f_np)
        f2t_np = np.asarray(f2t_np)

        frame_num = f2t_np.shape[0]
        is_visited = np.zeros(frame_num, dtype=bool)
        is_selected = np.zeros(frame_num, dtype=np.int64)
        # torch.sort(descending=True) — identical up to tie-breaking order.
        sorted_indices = np.argsort(-f2t_np, kind='stable')
        sorted_scores = f2t_np[sorted_indices]

        idx = 0
        while idx < frame_num and int(is_selected.sum()) < self.max_frame_num:
            if sorted_scores[idx] < self.f2t_thrd:
                break
            cur_frame = int(sorted_indices[idx])
            if is_visited[cur_frame]:
                idx += 1
                continue
            is_visited[cur_frame] = True
            is_selected[cur_frame] = 1
            is_similar = f2f_np[cur_frame] > self.f2f_thrd
            is_visited |= is_similar
            idx += 1

        is_selected = self.distribute_frames(is_selected.tolist(),
                                             self.max_frame_num)
        is_selected = jnp.asarray(is_selected, dtype=jnp.int32)
        return is_selected, f2t_scores, img_embs, text_embs

    # ---- verbatim port of distribute_frames (pure scalar host logic) --------
    def distribute_frames(self, is_selected, max_frame_num):
        frame_num = len(is_selected)
        existing_frame_num = max_frame_num - sum(is_selected)
        existing = [i for i, val in enumerate(is_selected) if val == 1]
        gaps = []
        if not existing:
            gaps.append((0, frame_num - 1))
        else:
            if existing[0] > 0:
                gaps.append((0, existing[0] - 1))
            for i in range(1, len(existing)):
                if existing[i - 1] + 1 <= existing[i] - 1:
                    gaps.append((existing[i - 1] + 1, existing[i] - 1))
            if existing[-1] < frame_num - 1:
                gaps.append((existing[-1] + 1, frame_num - 1))

        def total_k(D):
            total = 0
            for start, end in gaps:
                length = end - start + 1
                if length <= 0:
                    continue
                k = math.ceil(length / D) - 1
                total += k
            return total

        left = 1
        right = frame_num
        while left < right:
            mid = (left + right) // 2
            required = total_k(mid)
            if required <= existing_frame_num:
                right = mid
            else:
                left = mid + 1
        D = left
        sum_k = 0
        assigned = []
        for start, end in gaps:
            length = end - start + 1
            if length <= 0:
                continue
            k = math.ceil(length / D) - 1
            if k > 0:
                sum_k += k
                step = math.ceil(length / (k + 1))
                positions = []
                for i in range(k):
                    pos = start + step * (i + 1)
                    if pos > end:
                        pos = end
                    positions.append(pos)
                assigned.append((start, end, positions))
        s_prime = is_selected.copy()
        for start, end, positions in assigned:
            for pos in positions:
                s_prime[pos] = 1
        remaining = existing_frame_num - sum_k
        if remaining > 0:
            for start, end in reversed(gaps):
                for pos in range(end, start - 1, -1):
                    if s_prime[pos] == 0:
                        s_prime[pos] = 1
                        remaining -= 1
                        if remaining == 0:
                            break
                if remaining == 0:
                    break
        return s_prime


# --------------------------------- main ---------------------------------------

if __name__ == "__main__":
    key = jax.random.PRNGKey(0)
    k_img, k_txt = jax.random.split(key)

    # Small, module-consistent shapes:
    #   8 video frames, 3x16x16 pixels each (NCHW), text feature vector of 64.
    F, C, H, W = 8, 3, 16, 16
    T_FEAT = 64
    EMB_DIM = 32

    image_inputs = jax.random.normal(k_img, (F, C, H, W), dtype=jnp.float32)
    text_inputs = jax.random.normal(k_txt, (1, T_FEAT), dtype=jnp.float32)

    config = {'f2f_thrd': 0.85, 'f2t_thrd': -1, 'max_frame_num': 4}
    selector = SeqFrameSelector(config, img_feat_dim=C * H * W,
                                txt_feat_dim=T_FEAT, emb_dim=EMB_DIM)

    is_selected, f2t_scores, img_embs, text_embs = selector.forward(
        image_inputs, text_inputs)

    jax.block_until_ready((is_selected, f2t_scores, img_embs, text_embs))

    # ---- sanity checks -------------------------------------------------------
    assert is_selected.shape == (F,)
    assert f2t_scores.shape == (F,)
    assert img_embs.shape == (F, EMB_DIM)
    assert text_embs.shape == (1, EMB_DIM)
    assert bool(jnp.all(jnp.isfinite(f2t_scores)))

    # numerical cross-check against a plain-JAX reference (same bf16 cast).
    # NOTE: bf16 encoder inputs introduce ~0.4% relative error vs an f32 CLIP;
    # decisions near f2f_thrd/f2t_thrd can differ from an f32 reference.
    x_img_host = image_inputs.reshape(F, -1).astype(jnp.bfloat16)
    img_ref = jnp.dot(x_img_host, selector.w_img[:C * H * W, :EMB_DIM],
                      preferred_element_type=jnp.float32)
    txt_ref = jnp.dot(text_inputs.astype(jnp.bfloat16),
                      selector.w_txt[:T_FEAT, :EMB_DIM],
                      preferred_element_type=jnp.float32)

    def _l2n(x):
        return x * jax.lax.rsqrt(jnp.sum(x * x, axis=-1, keepdims=True) + 1e-12)

    f2t_ref = (_l2n(img_ref) @ _l2n(txt_ref).T).reshape(-1)
    f2f_ref = _l2n(img_ref) @ _l2n(img_ref).T
    _, _, f2f_scores_out, _ = selector.process(image_inputs, text_inputs)

    np.testing.assert_allclose(np.asarray(img_embs), np.asarray(img_ref),
                               rtol=2e-3, atol=2e-3)
    np.testing.assert_allclose(np.asarray(text_embs), np.asarray(txt_ref),
                               rtol=2e-3, atol=2e-3)
    np.testing.assert_allclose(np.asarray(f2t_scores), np.asarray(f2t_ref),
                               rtol=2e-3, atol=2e-3)
    np.testing.assert_allclose(np.asarray(f2f_scores_out), np.asarray(f2f_ref),
                               rtol=2e-3, atol=2e-3)

    print("KERNEL_OK")
</pallas_src>

<mosaic_0001>
module attributes {stable_mosaic.version = 11 : i64} {
  func.func @_frame_selector_kernel(%arg0: i32, %arg1: memref<8x256xbf16, #tpu.memory_space<vmem>>, %arg2: memref<256x128xbf16, #tpu.memory_space<vmem>>, %arg3: memref<1x64xbf16, #tpu.memory_space<vmem>>, %arg4: memref<64x128xbf16, #tpu.memory_space<vmem>>, %arg5: memref<8x128xf32, #tpu.memory_space<vmem>>, %arg6: memref<1x128xf32, #tpu.memory_space<vmem>>, %arg7: memref<8x8xf32, #tpu.memory_space<vmem>>, %arg8: memref<8x1xf32, #tpu.memory_space<vmem>>, %arg9: memref<8x128xf32, #tpu.memory_space<vmem>>) attributes {dimension_semantics = [#tpu.dimension_semantics<arbitrary>], iteration_bounds = array<i64: 3>, scalar_prefetch = 0 : i64, scratch_operands = 1 : i64, tpu.core_type = #tpu.core_type<tc>, window_params = [{transform_indices = @transform_0, window_bounds = array<i64: 8, 256>}, {transform_indices = @transform_1, window_bounds = array<i64: 256, 128>}, {pipeline_mode = #tpu.pipeline_mode<synchronous>, transform_indices = @transform_2, window_bounds = array<i64: 1, 64>}, {pipeline_mode = #tpu.pipeline_mode<synchronous>, transform_indices = @transform_3, window_bounds = array<i64: 64, 128>}, {pipeline_mode = #tpu.pipeline_mode<synchronous>, transform_indices = @transform_4, window_bounds = array<i64: 8, 128>}, {pipeline_mode = #tpu.pipeline_mode<synchronous>, transform_indices = @transform_5, window_bounds = array<i64: 1, 128>}, {pipeline_mode = #tpu.pipeline_mode<synchronous>, transform_indices = @transform_6, window_bounds = array<i64: 8, 8>}, {pipeline_mode = #tpu.pipeline_mode<synchronous>, transform_indices = @transform_7, window_bounds = array<i64: 8, 1>}]} {
    %c0_i32 = arith.constant 0 : i32
    %0 = arith.cmpi eq, %arg0, %c0_i32 : i32
    %1 = arith.extui %0 : i1 to i32
    %c0_i32_0 = arith.constant 0 : i32
    %2 = arith.cmpi ne, %1, %c0_i32_0 : i32
    scf.if %2 {
      %cst_9 = arith.constant 0.000000e+00 : f32
      %12 = vector.broadcast %cst_9 : f32 to vector<8x128xf32>
      %c0_10 = arith.constant 0 : index
      %c0_11 = arith.constant 0 : index
      %13 = vector.load %arg9[%c0_10, %c0_11] : memref<8x128xf32, #tpu.memory_space<vmem>>, vector<8x128xf32>
      tpu.vector_store %arg9[%c0_10, %c0_11], %12 {strides = array<i32>} : memref<8x128xf32, #tpu.memory_space<vmem>>, vector<8x128xf32>,
    } else {
    }
    %c0 = arith.constant 0 : index
    %c0_1 = arith.constant 0 : index
    %3 = vector.load %arg9[%c0, %c0_1] : memref<8x128xf32, #tpu.memory_space<vmem>>, vector<8x128xf32>
    %c0_2 = arith.constant 0 : index
    %c0_3 = arith.constant 0 : index
    %4 = vector.load %arg1[%c0_2, %c0_3] : memref<8x256xbf16, #tpu.memory_space<vmem>>, vector<8x256xbf16>
    %c0_4 = arith.constant 0 : index
    %c0_5 = arith.constant 0 : index
    %5 = vector.load %arg2[%c0_4, %c0_5] : memref<256x128xbf16, #tpu.memory_space<vmem>>, vector<256x128xbf16>
    %cst = arith.constant dense<0.000000e+00> : vector<8x128xf32>
    %6 = tpu.matmul %4, %5, %cst {dimension_numbers = #tpu.dot_dimension_numbers<[1], [0], [0], [1], [0, 0, 1, 1], [], []>} : vector<8x256xbf16>, vector<256x128xbf16>, vector<8x128xf32> -> vector<8x128xf32>
    %7 = arith.addf %3, %6 : vector<8x128xf32>
    %c0_6 = arith.constant 0 : index
    %c0_7 = arith.constant 0 : index
    %8 = vector.load %arg9[%c0_6, %c0_7] : memref<8x128xf32, #tpu.memory_space<vmem>>, vector<8x128xf32>
    tpu.vector_store %arg9[%c0_6, %c0_7], %7 {strides = array<i32>} : memref<8x128xf32, #tpu.memory_space<vmem>>, vector<8x128xf32>,
    %c2_i32 = arith.constant 2 : i32
    %9 = arith.cmpi eq, %arg0, %c2_i32 : i32
    %10 = arith.extui %9 : i1 to i32
    %c0_i32_8 = arith.constant 0 : i32
    %11 = arith.cmpi ne, %10, %c0_i32_8 : i32
    scf.if %11 {
      %c0_9 = arith.constant 0 : index
      %c0_10 = arith.constant 0 : index
      %12 = vector.load %arg9[%c0_9, %c0_10] : memref<8x128xf32, #tpu.memory_space<vmem>>, vector<8x128xf32>
      %c0_11 = arith.constant 0 : index
      %c0_12 = arith.constant 0 : index
      %13 = vector.load %arg3[%c0_11, %c0_12] : memref<1x64xbf16, #tpu.memory_space<vmem>>, vector<1x64xbf16>
      %c0_13 = arith.constant 0 : index
      %c0_14 = arith.constant 0 : index
      %14 = vector.load %arg4[%c0_13, %c0_14] : memref<64x128xbf16, #tpu.memory_space<vmem>>, vector<64x128xbf16>
      %cst_15 = arith.constant dense<0.000000e+00> : vector<1x128xf32>
      %15 = tpu.matmul %13, %14, %cst_15 {dimension_numbers = #tpu.dot_dimension_numbers<[1], [0], [0], [1], [0, 0, 1, 1], [], []>} : vector<1x64xbf16>, vector<64x128xbf16>, vector<1x128xf32> -> vector<1x128xf32>
      %c0_16 = arith.constant 0 : index
      %c0_17 = arith.constant 0 : index
      %16 = vector.load %arg5[%c0_16, %c0_17] : memref<8x128xf32, #tpu.memory_space<vmem>>, vector<8x128xf32>
      tpu.vector_store %arg5[%c0_16, %c0_17], %12 {strides = array<i32>} : memref<8x128xf32, #tpu.memory_space<vmem>>, vector<8x128xf32>,
      %c0_18 = arith.constant 0 : index
      %c0_19 = arith.constant 0 : index
      %17 = vector.load %arg6[%c0_18, %c0_19] : memref<1x128xf32, #tpu.memory_space<vmem>>, vector<1x128xf32>
      tpu.vector_store %arg6[%c0_18, %c0_19], %15 {strides = array<i32>} : memref<1x128xf32, #tpu.memory_space<vmem>>, vector<1x128xf32>,
      %18 = arith.mulf %12, %12 : vector<8x128xf32>
      %cst_20 = arith.constant dense<0.000000e+00> : vector<8xf32>
      %19 = vector.multi_reduction <add>, %18, %cst_20 [1] : vector<8x128xf32> to vector<8xf32>
      %20 = vector.shape_cast %19 : vector<8xf32> to vector<8x1xf32>
      %cst_21 = arith.constant 9.99999996E-13 : f32
      %21 = vector.broadcast %cst_21 : f32 to vector<8x1xf32>
      %22 = arith.addf %20, %21 : vector<8x1xf32>
      %23 = math.rsqrt %22 : vector<8x1xf32>
      %24 = vector.broadcast %23 : vector<8x1xf32> to vector<8x128xf32>
      %25 = arith.mulf %12, %24 : vector<8x128xf32>
      %26 = arith.mulf %15, %15 : vector<1x128xf32>
      %cst_22 = arith.constant dense<0.000000e+00> : vector<1xf32>
      %27 = vector.multi_reduction <add>, %26, %cst_22 [1] : vector<1x128xf32> to vector<1xf32>
      %28 = vector.shape_cast %27 : vector<1xf32> to vector<1x1xf32>
      %cst_23 = arith.constant 9.99999996E-13 : f32
      %29 = vector.broadcast %cst_23 : f32 to vector<1x1xf32>
      %30 = arith.addf %28, %29 : vector<1x1xf32>
      %31 = math.rsqrt %30 : vector<1x1xf32>
      %32 = vector.broadcast %31 : vector<1x1xf32> to vector<1x128xf32>
      %33 = arith.mulf %15, %32 : vector<1x128xf32>
      %cst_24 = arith.constant dense<0.000000e+00> : vector<8x8xf32>
      %34 = tpu.matmul %25, %25, %cst_24 {dimension_numbers = #tpu.dot_dimension_numbers<[1], [1], [0], [0], [0, 0, 1, 0], [], []>} : vector<8x128xf32>, vector<8x128xf32>, vector<8x8xf32> -> vector<8x8xf32>
      %c0_25 = arith.constant 0 : index
      %c0_26 = arith.constant 0 : index
      %35 = vector.load %arg7[%c0_25, %c0_26] : memref<8x8xf32, #tpu.memory_space<vmem>>, vector<8x8xf32>
      tpu.vector_store %arg7[%c0_25, %c0_26], %34 {strides = array<i32>} : memref<8x8xf32, #tpu.memory_space<vmem>>, vector<8x8xf32>,
      %36 = vector.broadcast %33 : vector<1x128xf32> to vector<8x128xf32>
      %37 = arith.mulf %25, %36 : vector<8x128xf32>
      %cst_27 = arith.constant dense<0.000000e+00> : vector<8xf32>
      %38 = vector.multi_reduction <add>, %37, %cst_27 [1] : vector<8x128xf32> to vector<8xf32>
      %39 = vector.shape_cast %38 : vector<8xf32> to vector<8x1xf32>
      %c0_28 = arith.constant 0 : index
      %c0_29 = arith.constant 0 : index
      %40 = vector.load %arg8[%c0_28, %c0_29] : memref<8x1xf32, #tpu.memory_space<vmem>>, vector<8x1xf32>
      tpu.vector_store %arg8[%c0_28, %c0_29], %39 {strides = array<i32>} : memref<8x1xf32, #tpu.memory_space<vmem>>, vector<8x1xf32>,
    } else {
    }
    return
  }
  func.func @transform_0(%arg0: i32) -> (i32, i32) {
    %c0_i32 = arith.constant 0 : i32
    %c0_i32_0 = arith.constant 0 : i32
    return %c0_i32, %arg0 : i32, i32
  }
  func.func @transform_1(%arg0: i32) -> (i32, i32) {
    %c0_i32 = arith.constant 0 : i32
    %c0_i32_0 = arith.constant 0 : i32
    return %arg0, %c0_i32 : i32, i32
  }
  func.func @transform_2(%arg0: i32) -> (i32, i32) {
    %c0_i32 = arith.constant 0 : i32
    %c0_i32_0 = arith.constant 0 : i32
    %c0_i32_1 = arith.constant 0 : i32
    return %c0_i32, %c0_i32_0 : i32, i32
  }
  func.func @transform_3(%arg0: i32) -> (i32, i32) {
    %c0_i32 = arith.constant 0 : i32
    %c0_i32_0 = arith.constant 0 : i32
    %c0_i32_1 = arith.constant 0 : i32
    return %c0_i32, %c0_i32_0 : i32, i32
  }
  func.func @transform_4(%arg0: i32) -> (i32, i32) {
    %c0_i32 = arith.constant 0 : i32
    %c0_i32_0 = arith.constant 0 : i32
    %c0_i32_1 = arith.constant 0 : i32
    return %c0_i32, %c0_i32_0 : i32, i32
  }
  func.func @transform_5(%arg0: i32) -> (i32, i32) {
    %c0_i32 = arith.constant 0 : i32
    %c0_i32_0 = arith.constant 0 : i32
    %c0_i32_1 = arith.constant 0 : i32
    return %c0_i32, %c0_i32_0 : i32, i32
  }
  func.func @transform_6(%arg0: i32) -> (i32, i32) {
    %c0_i32 = arith.constant 0 : i32
    %c0_i32_0 = arith.constant 0 : i32
    %c0_i32_1 = arith.constant 0 : i32
    return %c0_i32, %c0_i32_0 : i32, i32
  }
  func.func @transform_7(%arg0: i32) -> (i32, i32) {
    %c0_i32 = arith.constant 0 : i32
    %c0_i32_0 = arith.constant 0 : i32
    %c0_i32_1 = arith.constant 0 : i32
    return %c0_i32, %c0_i32_0 : i32, i32
  }
}

</mosaic_0001>

<llo_original>
// kernel: _process_device.1
$region0: #{_process_device.1}
  #allocation0 [shape = 'u32[]', space=smem, size = 0x4, offset = 0x4, fixed_abs, tag = 'smem constant byte address 0x4 - core index']
  #allocation1 [shape = 'u32[144,128]{1,0:T(1,128)}', space=vmem, size = 0x12000, scoped, tag = 'internal scratch']
  #allocation2 [shape = 'f32[8,128]{1,0:T(8,128)}', space=vmem, size = 0x1000, scoped, tag = 'scratch operand']
  %s0 = inlined_call_operand.vmem [shape: bf16[8,768], index: 0, kind: input, shape index: {}]
  %s1 = inlined_call_operand.vmem [shape: bf16[768,128], index: 1, kind: input, shape index: {}]
  %s2 = inlined_call_operand.vmem [shape: bf16[1,64], index: 2, kind: input, shape index: {}]
  %s3 = inlined_call_operand.vmem [shape: bf16[64,128], index: 3, kind: input, shape index: {}]
  %s4 = inlined_call_operand.hbm [shape: f32[8,128], index: 4, kind: output, shape index: {0}]
  %s5 = inlined_call_operand.hbm [shape: f32[1,128], index: 5, kind: output, shape index: {1}]
  %s6 = inlined_call_operand.hbm [shape: f32[8,8], index: 6, kind: output, shape index: {2}]
  %s7 = inlined_call_operand.vmem [shape: f32[8,1], index: 7, kind: output, shape index: {3}]
  %8 = xla_tuple %s4, %s5, %s6, %s7
  %s9 = sld [smem:[#allocation0]]
  $region81: #{_process_device.1} parent=0
    _
  %s11 = ssub.s32 1, %s9
  %s12 = scalar_select 0, %s11, %s9
  $region1: #{_process_device.1} parent=0
    #allocation3 [shape = 'u8[4096]{0}', space=vmem, size = 0x1000, scoped, tag = 'output window, operand 0, single buffered']
    #allocation4 [shape = 's32[2]{0}', space=sflag, size = 0x8, scoped, tag = 'scoped memory for _process_device.1']
    #allocation5 [shape = 'u8[512]{0}', space=vmem, size = 0x400, scoped, tag = 'output window, operand 1, single buffered']
    #allocation6 [shape = 's32[1]{0}', space=sflag, size = 0x4, scoped, tag = 'scoped memory for _process_device.1']
    #allocation7 [shape = 'u8[4096]{0}', space=vmem, size = 0x1000, scoped, tag = 'output window, operand 2, single buffered']
    %13 = vsyncpa [#allocation4], 0
    %14 = vsyncpa [#allocation6], 0
    loop: start=0, step=1, limit=5
    $region2: #{_process_device.1} parent=1 // loop_pre_header
      _
    $region3: #{_process_device.1} parent=1 // loop_header
      %s16 = sphi 0, %s20
      %p17 = scmp.ge.s32.totalorder %s16, 5
      %s26 = sphi 0, %s28
      %s29 = sphi 0, %s26
      %s30 = sphi 0, %s29
      %s46 = sphi 0, %s30
      %s52 = sphi 0, %s54
      %s55 = sphi 0, %s52
      %s56 = sphi 0, %s55
      %s72 = sphi 0, %s56
      %s76 = sphi 0, %s76
      %s78 = sphi 0, %s76
      %s79 = sphi 0, %s78
      %s93 = sphi 0, %s79
      %s97 = sphi 0, %s97
      %s99 = sphi 0, %s97
      %s100 = sphi 0, %s99
      %s114 = sphi 0, %s100
      %s118 = sphi 0, %s118
      %s120 = sphi 0, %s118
      %s121 = sphi 0, %s120
      %s135 = sphi 0, %s121
      %s139 = sphi 0, %s139
      %s141 = sphi 0, %s139
      %s142 = sphi 0, %s141
      %s156 = sphi 0, %s142
      %s160 = sphi 0, %s160
      %s162 = sphi 0, %s160
      %s163 = sphi 0, %s162
      %s177 = sphi 0, %s163
      %s181 = sphi 0, %s181
      %s183 = sphi 0, %s181
      %s184 = sphi 0, %s183
      %s198 = sphi 0, %s184
    $region4: #{_process_device.1} parent=1 // loop_header_branch
      %19 = sbr.rel (%p17) target = $region8
    $region5: #{_process_device.1} parent=1 // loop_body
      %s21 = ssub.s32 %s16, 1
      %s22 = ssub.s32 %s16, 2
      %s23 = sadd.s32 %s16, 1
      %s24 = ssub.s32 %s16, %s23
      %p25 = scmp.eq.s32.totalorder %s24, 0
      %s27 = sadd.s32 %s26, 1
      %s28 = scalar_select %p25, %s26, %s27
      %p31 = pneg %p25
      %p32 = scmp.eq.s32.totalorder %s16, 2
      %p33 = por %p31, %p32
      %p34 = scmp.ne.s32.totalorder %s26, %s29
      %p35 = scmp.eq.s32.totalorder %s16, 0
      %p36 = por %p34, %p35
      %p37 = scmp.ne.s32.totalorder %s26, %s29
      %p38 = scmp.eq.s32.totalorder %s21, 2
      %p39 = por %p37, %p38
      %p40 = scmp.ne.s32.totalorder %s29, %s30
      %p41 = scmp.eq.s32.totalorder %s21, 0
      %p42 = por %p40, %p41
      %p43 = scmp.ne.s32.totalorder %s29, %s30
      %p44 = scmp.eq.s32.totalorder %s22, 2
      %p45 = por %p43, %p44
      %p47 = scmp.ne.s32.totalorder %s30, %s46
      %p48 = scmp.eq.s32.totalorder %s22, 0
      %p49 = por %p47, %p48
      %s50 = ssub.s32 %s16, %s23
      %p51 = scmp.eq.s32.totalorder %s50, 0
      %s53 = sadd.s32 %s52, 1
      %s54 = scalar_select %p51, %s52, %s53
      %p57 = pneg %p51
      %p58 = scmp.eq.s32.totalorder %s16, 2
      %p59 = por %p57, %p58
      %p60 = scmp.ne.s32.totalorder %s52, %s55
      %p61 = scmp.eq.s32.totalorder %s16, 0
      %p62 = por %p60, %p61
      %p63 = scmp.ne.s32.totalorder %s52, %s55
      %p64 = scmp.eq.s32.totalorder %s21, 2
      %p65 = por %p63, %p64
      %p66 = scmp.ne.s32.totalorder %s55, %s56
      %p67 = scmp.eq.s32.totalorder %s21, 0
      %p68 = por %p66, %p67
      %p69 = scmp.ne.s32.totalorder %s55, %s56
      %p70 = scmp.eq.s32.totalorder %s22, 2
      %p71 = por %p69, %p70
      %p73 = scmp.ne.s32.totalorder %s56, %s72
      %p74 = scmp.eq.s32.totalorder %s22, 0
      %p75 = por %p73, %p74
      %s77 = sadd.s32 %s76, 1
      %p80 = scmp.eq.s32.totalorder %s16, 2
      %p81 = scmp.ne.s32.totalorder %s76, %s78
      %p82 = scmp.eq.s32.totalorder %s16, 0
      %p83 = por %p81, %p82
      %p84 = scmp.ne.s32.totalorder %s76, %s78
      %p85 = scmp.eq.s32.totalorder %s21, 2
      %p86 = por %p84, %p85
      %p87 = scmp.ne.s32.totalorder %s78, %s79
      %p88 = scmp.eq.s32.totalorder %s21, 0
      %p89 = por %p87, %p88
      %p90 = scmp.ne.s32.totalorder %s78, %s79
      %p91 = scmp.eq.s32.totalorder %s22, 2
      %p92 = por %p90, %p91
      %p94 = scmp.ne.s32.totalorder %s79, %s93
      %p95 = scmp.eq.s32.totalorder %s22, 0
      %p96 = por %p94, %p95
      %s98 = sadd.s32 %s97, 1
      %p101 = scmp.eq.s32.totalorder %s16, 2
      %p102 = scmp.ne.s32.totalorder %s97, %s99
      %p103 = scmp.eq.s32.totalorder %s16, 0
      %p104 = por %p102, %p103
      %p105 = scmp.ne.s32.totalorder %s97, %s99
      %p106 = scmp.eq.s32.totalorder %s21, 2
      %p107 = por %p105, %p106
      %p108 = scmp.ne.s32.totalorder %s99, %s100
      %p109 = scmp.eq.s32.totalorder %s21, 0
      %p110 = por %p108, %p109
      %p111 = scmp.ne.s32.totalorder %s99, %s100
      %p112 = scmp.eq.s32.totalorder %s22, 2
      %p113 = por %p111, %p112
      %p115 = scmp.ne.s32.totalorder %s100, %s114
      %p116 = scmp.eq.s32.totalorder %s22, 0
      %p117 = por %p115, %p116
      %s119 = sadd.s32 %s118, 1
      %p122 = scmp.eq.s32.totalorder %s16, 2
      %p123 = scmp.ne.s32.totalorder %s118, %s120
      %p124 = scmp.eq.s32.totalorder %s16, 0
      %p125 = por %p123, %p124
      %p126 = scmp.ne.s32.totalorder %s118, %s120
      %p127 = scmp.eq.s32.totalorder %s21, 2
      %p128 = por %p126, %p127
      %p129 = scmp.ne.s32.totalorder %s120, %s121
      %p130 = scmp.eq.s32.totalorder %s21, 0
      %p131 = por %p129, %p130
      %p132 = scmp.ne.s32.totalorder %s120, %s121
      %p133 = scmp.eq.s32.totalorder %s22, 2
      %p134 = por %p132, %p133
      %p136 = scmp.ne.s32.totalorder %s121, %s135
      %p137 = scmp.eq.s32.totalorder %s22, 0
      %p138 = por %p136, %p137
      %s140 = sadd.s32 %s139, 1
      %p143 = scmp.eq.s32.totalorder %s16, 2
      %p144 = scmp.ne.s32.totalorder %s139, %s141
      %p145 = scmp.eq.s32.totalorder %s16, 0
      %p146 = por %p144, %p145
      %p147 = scmp.ne.s32.totalorder %s139, %s141
      %p148 = scmp.eq.s32.totalorder %s21, 2
      %p149 = por %p147, %p148
      %p150 = scmp.ne.s32.totalorder %s141, %s142
      %p151 = scmp.eq.s32.totalorder %s21, 0
      %p152 = por %p150, %p151
      %p153 = scmp.ne.s32.totalorder %s141, %s142
      %p154 = scmp.eq.s32.totalorder %s22, 2
      %p155 = por %p153, %p154
      %p157 = scmp.ne.s32.totalorder %s142, %s156
      %p158 = scmp.eq.s32.totalorder %s22, 0
      %p159 = por %p157, %p158
      %s161 = sadd.s32 %s160, 1
      %p164 = scmp.eq.s32.totalorder %s16, 2
      %p165 = scmp.ne.s32.totalorder %s160, %s162
      %p166 = scmp.eq.s32.totalorder %s16, 0
      %p167 = por %p165, %p166
      %p168 = scmp.ne.s32.totalorder %s160, %s162
      %p169 = scmp.eq.s32.totalorder %s21, 2
      %p170 = por %p168, %p169
      %p171 = scmp.ne.s32.totalorder %s162, %s163
      %p172 = scmp.eq.s32.totalorder %s21, 0
      %p173 = por %p171, %p172
      %p174 = scmp.ne.s32.totalorder %s162, %s163
      %p175 = scmp.eq.s32.totalorder %s22, 2
      %p176 = por %p174, %p175
      %p178 = scmp.ne.s32.totalorder %s163, %s177
      %p179 = scmp.eq.s32.totalorder %s22, 0
      %p180 = por %p178, %p179
      %s182 = sadd.s32 %s181, 1
      %p185 = scmp.eq.s32.totalorder %s16, 2
      %p186 = scmp.ne.s32.totalorder %s181, %s183
      %p187 = scmp.eq.s32.totalorder %s16, 0
      %p188 = por %p186, %p187
      %p189 = scmp.ne.s32.totalorder %s181, %s183
      %p190 = scmp.eq.s32.totalorder %s21, 2
      %p191 = por %p189, %p190
      %p192 = scmp.ne.s32.totalorder %s183, %s184
      %p193 = scmp.eq.s32.totalorder %s21, 0
      %p194 = por %p192, %p193
      %p195 = scmp.ne.s32.totalorder %s183, %s184
      %p196 = scmp.eq.s32.totalorder %s22, 2
      %p197 = por %p195, %p196
      %p199 = scmp.ne.s32.totalorder %s184, %s198
      %p200 = scmp.eq.s32.totalorder %s22, 0
      %p201 = por %p199, %p200
      %p202 = scmp.le.s32.totalorder 1, %s16
      %p203 = scmp.lt.s32.totalorder %s16, 4
      %p204 = pnand %p202, %p203
      %p205 = pneg %p204
      // Predicated region
      $region9: #{_process_device.1} parent=5 // pred_check
        _
      $region10: #{_process_device.1} parent=5 // pred_check_branch
        %207 = sbr.rel (%p204) target = $region12
      $region11: #{_process_device.1} parent=5 // pred_region
        %s208 = ssub.s32 %s16, 1
        // Predicated region
        $region13: #{_process_device.1} parent=11 // pred_check
          %p209 = pneg %p89
        $region14: #{_process_device.1} parent=11 // pred_check_branch
          %211 = sbr.rel (%p209) target = $region16
        $region15: #{_process_device.1} parent=11 // pred_region
          _
        $region16: #{_process_device.1} parent=11 // pred_fallthru
          _
        // Predicated region
        $region17: #{_process_device.1} parent=11 // pred_check
          %p212 = pneg %p110
        $region18: #{_process_device.1} parent=11 // pred_check_branch
          %214 = sbr.rel (%p212) target = $region20
        $region19: #{_process_device.1} parent=11 // pred_region
          _
        $region20: #{_process_device.1} parent=11 // pred_fallthru
          _
      $region12: #{_process_device.1} parent=5 // pred_fallthru
        _
      %p215 = scmp.lt.s32.totalorder %s16, 3
      // Predicated region
      $region21: #{_process_device.1} parent=5 // pred_check
        %p216 = pneg %p215
      $region22: #{_process_device.1} parent=5 // pred_check_branch
        %218 = sbr.rel (%p216) target = $region24
      $region23: #{_process_device.1} parent=5 // pred_region
        // Predicated region
        $region25: #{_process_device.1} parent=23 // pred_check
          %p219 = pneg %p36
        $region26: #{_process_device.1} parent=23 // pred_check_branch
          %221 = sbr.rel (%p219) target = $region28
        $region27: #{_process_device.1} parent=23 // pred_region
          %s222 = smul.u32 2, %s16
          %p223 = scmp.lt.s32.totalorder %s222, 5
          %s224 = scalar_select %p223, %s222, 5
          %s225 = smul.addr %s224, 4
          %s226 = scalar_lea.vmem %s0, %s225
          %s227 = smul.u32 2, %s16
        $region28: #{_process_device.1} parent=23 // pred_fallthru
          _
        // Predicated region
        $region29: #{_process_device.1} parent=23 // pred_check
          %p228 = pneg %p62
        $region30: #{_process_device.1} parent=23 // pred_check_branch
          %230 = sbr.rel (%p228) target = $region32
        $region31: #{_process_device.1} parent=23 // pred_region
          %s231 = smul.u32 32, %s16
          %p232 = scmp.lt.s32.totalorder %s231, 95
          %s233 = scalar_select %p232, %s231, 95
          %s234 = smul.addr %s233, 4
          %s235 = scalar_lea.vmem %s1, %s234
          %s236 = smul.u32 32, %s16
        $region32: #{_process_device.1} parent=23 // pred_fallthru
          _
      $region24: #{_process_device.1} parent=5 // pred_fallthru
        _
      %p237 = scmp.le.s32.totalorder 1, %s16
      %p238 = scmp.lt.s32.totalorder %s16, 4
      %p239 = pnand %p237, %p238
      %p240 = pneg %p239
      // Predicated region
      $region33: #{_process_device.1} parent=5 // pred_check
        _
      $region34: #{_process_device.1} parent=5 // pred_check_branch
        %242 = sbr.rel (%p239) target = $region36
      $region35: #{_process_device.1} parent=5 // pred_region
        %s243 = ssub.s32 %s16, 1
        %s244 = smul.u32 2, %s21
        %p245 = scmp.lt.s32.totalorder %s244, 5
        %s246 = scalar_select %p245, %s244, 5
        %s247 = smul.addr %s246, 4
        %s248 = scalar_lea.vmem %s0, %s247
        %p249 = pneg %p42
        %p250 = pneg %p39
        %s251 = smul.u32 32, %s21
        %p252 = scmp.lt.s32.totalorder %s251, 95
        %s253 = scalar_select %p252, %s251, 95
        %s254 = smul.addr %s253, 4
        %s255 = scalar_lea.vmem %s1, %s254
        %p256 = pneg %p68
        %p257 = pneg %p65
        %p258 = pneg %p89
        %p259 = pneg %p86
        %p260 = pneg %p110
        %p261 = pneg %p107
        %p262 = pneg %p131
        %p263 = pneg %p128
        %p264 = pneg %p152
        %p265 = pneg %p149
        %p266 = pneg %p173
        %p267 = pneg %p170
        %p268 = pneg %p194
        %p269 = pneg %p191
        %s270 = smul.u32 2, %s21
        %p271 = scmp.lt.s32.totalorder %s270, 5
        %s272 = scalar_select %p271, %s270, 5
        %s273 = smul.addr %s272, 4
        %s274 = scalar_lea.vmem %s0, %s273
        %s275 = smul.u32 2, %s21
        %s276 = smul.u32 32, %s21
        %p277 = scmp.lt.s32.totalorder %s276, 95
        %s278 = scalar_select %p277, %s276, 95
        %s279 = smul.addr %s278, 4
        %s280 = scalar_lea.vmem %s1, %s279
        %s281 = smul.u32 32, %s21
        %p283 = scmp.eq.s32.totalorder %s21, 0
        // Predicated region
        $region37: #{_process_device.1} parent=35 // pred_check
          %p284 = pneg %p283
        $region38: #{_process_device.1} parent=35 // pred_check_branch
          %286 = sbr.rel (%p284) target = $region40
        $region39: #{_process_device.1} parent=35 // pred_region
          %287 = vst [vmem:[#allocation2] sm:$0xff] 0.0
        $region40: #{_process_device.1} parent=35 // pred_fallthru
          _
        %v288 = vld [vmem:[#allocation2] sm:$0xff]
        %v289 = vld [vmem:[%s274] sm:$0xff]
        %v290 = vld [vmem:[%s280] sm:$0xf]
        %v291 = vld [vmem:[%s280 + $0x4] sm:$0xf]
        %v292 = vld [vmem:[%s280 + $0x8] sm:$0xf]
        %v293 = vld [vmem:[%s280 + $0xc] sm:$0xf]
        %v294 = vld [vmem:[%s280 + $0x10] sm:$0xf]
        %v295 = vld [vmem:[%s280 + $0x14] sm:$0xf]
        %v296 = vld [vmem:[%s280 + $0x18] sm:$0xf]
        %v297 = vld [vmem:[%s280 + $0x1c] sm:$0xf]
        %v298 = vld [vmem:[%s280 + $0x20] sm:$0xf]
        %v299 = vld [vmem:[%s280 + $0x24] sm:$0xf]
        %v300 = vld [vmem:[%s280 + $0x28] sm:$0xf]
        %v301 = vld [vmem:[%s280 + $0x2c] sm:$0xf]
        %v302 = vld [vmem:[%s280 + $0x30] sm:$0xf]
        %v303 = vld [vmem:[%s280 + $0x34] sm:$0xf]
        %v304 = vld [vmem:[%s280 + $0x38] sm:$0xf]
        %v305 = vld [vmem:[%s280 + $0x3c] sm:$0xf]
        %v306 = vld [vmem:[%s280 + $0x40] sm:$0xf]
        %v307 = vld [vmem:[%s280 + $0x44] sm:$0xf]
        %v308 = vld [vmem:[%s280 + $0x48] sm:$0xf]
        %v309 = vld [vmem:[%s280 + $0x4c] sm:$0xf]
        %v310 = vld [vmem:[%s280 + $0x50] sm:$0xf]
        %v311 = vld [vmem:[%s280 + $0x54] sm:$0xf]
        %v312 = vld [vmem:[%s280 + $0x58] sm:$0xf]
        %v313 = vld [vmem:[%s280 + $0x5c] sm:$0xf]
        %v314 = vld [vmem:[%s280 + $0x60] sm:$0xf]
        %v315 = vld [vmem:[%s280 + $0x64] sm:$0xf]
        %v316 = vld [vmem:[%s280 + $0x68] sm:$0xf]
        %v317 = vld [vmem:[%s280 + $0x6c] sm:$0xf]
        %v318 = vld [vmem:[%s280 + $0x70] sm:$0xf]
        %v319 = vld [vmem:[%s280 + $0x74] sm:$0xf]
        %v320 = vld [vmem:[%s280 + $0x78] sm:$0xf]
        %v321 = vld [vmem:[%s280 + $0x7c] sm:$0xf]
        %v323 = vunpack.c.l.b16 %v289
        %v324 = vunpack.c.h.b16 %v289
        %v325 = vpack.c.b16 %v323, %v323
        %v326 = vpack.c.b16 %v324, %v324
        %v361 = vunpack.c.l.b16 %v290
        %v362 = vunpack.c.l.b16 %v291
        %v363 = vunpack.c.l.b16 %v292
        %v364 = vunpack.c.l.b16 %v293
        %v365 = vunpack.c.l.b16 %v294
        %v366 = vunpack.c.l.b16 %v295
        %v367 = vunpack.c.l.b16 %v296
        %v368 = vunpack.c.l.b16 %v297
        %v369 = vunpack.c.l.b16 %v298
        %v370 = vunpack.c.l.b16 %v299
        %v371 = vunpack.c.l.b16 %v300
        %v372 = vunpack.c.l.b16 %v301
        %v373 = vunpack.c.l.b16 %v302
        %v374 = vunpack.c.l.b16 %v303
        %v375 = vunpack.c.l.b16 %v304
        %v376 = vunpack.c.l.b16 %v305
        %v377 = vunpack.c.l.b16 %v306
        %v378 = vunpack.c.l.b16 %v307
        %v379 = vunpack.c.l.b16 %v308
        %v380 = vunpack.c.l.b16 %v309
        %v381 = vunpack.c.l.b16 %v310
        %v382 = vunpack.c.l.b16 %v311
        %v383 = vunpack.c.l.b16 %v312
        %v384 = vunpack.c.l.b16 %v313
        %v385 = vunpack.c.l.b16 %v314
        %v386 = vunpack.c.l.b16 %v315
        %v387 = vunpack.c.l.b16 %v316
        %v388 = vunpack.c.l.b16 %v317
        %v389 = vunpack.c.l.b16 %v318
        %v390 = vunpack.c.l.b16 %v319
        %v391 = vunpack.c.l.b16 %v320
        %v392 = vunpack.c.l.b16 %v321
        %v393 = vpack.c.b16 %v362, %v361
        %v394 = vpack.c.b16 %v364, %v363
        %v395 = vpack.c.b16 %v366, %v365
        %v396 = vpack.c.b16 %v368, %v367
        %v397 = vpack.c.b16 %v370, %v369
        %v398 = vpack.c.b16 %v372, %v371
        %v399 = vpack.c.b16 %v374, %v373
        %v400 = vpack.c.b16 %v376, %v375
        %v401 = vpack.c.b16 %v378, %v377
        %v402 = vpack.c.b16 %v380, %v379
        %v403 = vpack.c.b16 %v382, %v381
        %v404 = vpack.c.b16 %v384, %v383
        %v405 = vpack.c.b16 %v386, %v385
        %v406 = vpack.c.b16 %v388, %v387
        %v407 = vpack.c.b16 %v390, %v389
        %v408 = vpack.c.b16 %v392, %v391
        %425 = vmatprep.subr.bf16.mxu0 0
        %426 = vmatpush1.bf16.msra.mxu0 %v393
        %427 = vmatprep.subr.bf16.mxu0 0
        %428 = vmatpush1.bf16.msra.mxu0 %v394
        %429 = vmatprep.subr.bf16.mxu0 0
        %430 = vmatpush1.bf16.msra.mxu0 %v395
        %431 = vmatprep.subr.bf16.mxu0 0
        %432 = vmatpush1.bf16.msra.mxu0 %v396
        %433 = vmatprep.subr.bf16.mxu0 0
        %434 = vmatpush1.bf16.msra.mxu0 %v397
        %435 = vmatprep.subr.bf16.mxu0 0
        %436 = vmatpush1.bf16.msra.mxu0 %v398
        %437 = vmatprep.subr.bf16.mxu0 0
        %438 = vmatpush1.bf16.msra.mxu0 %v399
        %439 = vmatprep.subr.bf16.mxu0 0
        %440 = vmatpush1.bf16.msra.mxu0 %v400
        %441 = vmatprep.subr.bf16.mxu0 0
        %442 = vmatpush1.bf16.msra.mxu0 %v401
        %443 = vmatprep.subr.bf16.mxu0 0
        %444 = vmatpush1.bf16.msra.mxu0 %v402
        %445 = vmatprep.subr.bf16.mxu0 0
        %446 = vmatpush1.bf16.msra.mxu0 %v403
        %447 = vmatprep.subr.bf16.mxu0 0
        %448 = vmatpush1.bf16.msra.mxu0 %v404
        %449 = vmatprep.subr.bf16.mxu0 0
        %450 = vmatpush1.bf16.msra.mxu0 %v405
        %451 = vmatprep.subr.bf16.mxu0 0
        %452 = vmatpush1.bf16.msra.mxu0 %v406
        %453 = vmatprep.subr.bf16.mxu0 0
        %454 = vmatpush1.bf16.msra.mxu0 %v407
        %455 = vmatprep.subr.bf16.mxu0 0
        %456 = vmatpush1.bf16.msra.mxu0 %v408
        %457 = vmatprep.mubr.bf16.mxu0 %v326
        %458 = vmatmul.mubr.bf16.gmra.mrb[0].mxu0 %v325
        %v459 = vpop.f32.mrb[0].mxu0
        %v460 = vadd.f32 0.0, %v459
        %v461 = vpop.f32.mrb[0].mxu0
        %v462 = vpop.f32.mrb[0].mxu0
        %v463 = vpop.f32.mrb[0].mxu0
        %464 = vdwg.mxu0
        %v465 = vadd.f32 %v288, %v460
        %466 = vst [vmem:[#allocation2] sm:$0xff] %v465
        %p467 = scmp.eq.s32.totalorder %s21, 2
        // Predicated region
        $region41: #{_process_device.1} parent=35 // pred_check
          %p468 = pneg %p467
        $region42: #{_process_device.1} parent=35 // pred_check_branch
          %470 = sbr.rel (%p468) target = $region44
        $region43: #{_process_device.1} parent=35 // pred_region
          %v471 = vld [vmem:[#allocation2] sm:$0xff]
          %v472 = vld [vmem:[%s2] sm:$0x1]
          %v473 = vld [vmem:[%s3] sm:$0xf]
          %v474 = vld [vmem:[%s3 + $0x4] sm:$0xf]
          %v475 = vld [vmem:[%s3 + $0x8] sm:$0xf]
          %v476 = vld [vmem:[%s3 + $0xc] sm:$0xf]
          %v477 = vld [vmem:[%s3 + $0x10] sm:$0xf]
          %v478 = vld [vmem:[%s3 + $0x14] sm:$0xf]
          %v479 = vld [vmem:[%s3 + $0x18] sm:$0xf]
          %v480 = vld [vmem:[%s3 + $0x1c] sm:$0xf]
          %v489 = vunpack.c.l.b16 %v473
          %v490 = vunpack.c.l.b16 %v474
          %v491 = vunpack.c.l.b16 %v475
          %v492 = vunpack.c.l.b16 %v476
          %v493 = vunpack.c.l.b16 %v477
          %v494 = vunpack.c.l.b16 %v478
          %v495 = vunpack.c.l.b16 %v479
          %v496 = vunpack.c.l.b16 %v480
          %v497 = vpack.c.b16 %v490, %v489
          %v498 = vpack.c.b16 %v492, %v491
          %v499 = vpack.c.b16 %v494, %v493
          %v500 = vpack.c.b16 %v496, %v495
          %vm505 = vcmask 523264
          %v507 = vsel %vm505, %v472, 0
          %509 = vmatprep.subr.bf16.mxu0 0
          %510 = vmatpush1.bf16.msra.mxu0 %v497
          %511 = vmatprep.subr.bf16.mxu0 0
          %512 = vmatpush1.bf16.msra.mxu0 %v498
          %513 = vmatprep.subr.bf16.mxu0 0
          %514 = vmatpush1.bf16.msra.mxu0 %v499
          %515 = vmatprep.subr.bf16.mxu0 0
          %516 = vmatpush1.bf16.msra.mxu0 %v500
          %517 = vmatprep.subr.bf16.mxu0 0
          %518 = vmatpush1.bf16.msra.mxu0 0
          %519 = vmatprep.subr.bf16.mxu0 0
          %520 = vmatpush1.bf16.msra.mxu0 0
          %521 = vmatprep.subr.bf16.mxu0 0
          %522 = vmatpush1.bf16.msra.mxu0 0
          %523 = vmatprep.subr.bf16.mxu0 0
          %524 = vmatpush1.bf16.msra.mxu0 0
          %525 = vmatprep.subr.bf16.mxu0 0
          %526 = vmatpush1.bf16.msra.mxu0 0
          %527 = vmatprep.subr.bf16.mxu0 0
          %528 = vmatpush1.bf16.msra.mxu0 0
          %529 = vmatprep.subr.bf16.mxu0 0
          %530 = vmatpush1.bf16.msra.mxu0 0
          %531 = vmatprep.subr.bf16.mxu0 0
          %532 = vmatpush1.bf16.msra.mxu0 0
          %533 = vmatprep.subr.bf16.mxu0 0
          %534 = vmatpush1.bf16.msra.mxu0 0
          %535 = vmatprep.subr.bf16.mxu0 0
          %536 = vmatpush1.bf16.msra.mxu0 0
          %537 = vmatprep.subr.bf16.mxu0 0
          %538 = vmatpush1.bf16.msra.mxu0 0
          %539 = vmatprep.subr.bf16.mxu0 0
          %540 = vmatpush1.bf16.msra.mxu0 0
          %541 = vmatprep.mubr.bf16.mxu0 0
          %542 = vmatmul.mubr.bf16.gmra.mrb[0].mxu0 %v507
          %v543 = vpop.f32.mrb[0].mxu0
          %v544 = vadd.f32 0.0, %v543
          %v545 = vpop.f32.mrb[0].mxu0
          %v546 = vpop.f32.mrb[0].mxu0
          %v547 = vpop.f32.mrb[0].mxu0
          %548 = vdwg.mxu0
          %549 = vst [vmem:[#allocation3] sm:$0xff] %v471
          %550 = vst [vmem:[#allocation5] sm:$0x1] %v544
          %v551 = vmul.f32 %v471, %v471
          %552 = vadd.xlane.f32.xlu0 %v551
          %v553 = vpop.xlane.xlu0 %552
          %v554 = vadd.f32 %v553, 1e-12
          %v555 = vrsqrt.pop %v554
          %v556 = vmul.f32 %v471, %v555
          %v557 = vmul.f32 %v544, %v544
          %vm558 = vcmask 1040384
          %v559 = vsel %vm558, %v557, 0.0
          %560 = vadd.xlane.f32.xlu0 %v559
          %v561 = vpop.xlane.xlu0 %560
          %v562 = vadd.f32 %v561, 1e-12
          %v563 = vrsqrt.pop %v562
          %v564 = vmul.f32 %v544, %v563
          %565 = vmatprep.subr.mxu0 0.0
          %566 = vmatpush1.xpose.msra.mxu0 %v556
          %567 = vmatprep.subr.mxu0 0.0
          %568 = vmatpush1.xpose.msra.mxu0 0.0
          %569 = vmatprep.subr.mxu0 0.0
          %570 = vmatpush1.xpose.msra.mxu0 0.0
          %571 = vmatprep.subr.mxu0 0.0
          %572 = vmatpush1.xpose.msra.mxu0 0.0
          %573 = vmatprep.subr.mxu0 0.0
          %574 = vmatpush1.xpose.msra.mxu0 0.0
          %575 = vmatprep.subr.mxu0 0.0
          %576 = vmatpush1.xpose.msra.mxu0 0.0
          %577 = vmatprep.subr.mxu0 0.0
          %578 = vmatpush1.xpose.msra.mxu0 0.0
          %579 = vmatprep.subr.mxu0 0.0
          %580 = vmatpush1.xpose.msra.mxu0 0.0
          %581 = vmatprep.subr.mxu0 0.0
          %582 = vmatpush1.xpose.msra.mxu0 0.0
          %583 = vmatprep.subr.mxu0 0.0
          %584 = vmatpush1.xpose.msra.mxu0 0.0
          %585 = vmatprep.subr.mxu0 0.0
          %586 = vmatpush1.xpose.msra.mxu0 0.0
          %587 = vmatprep.subr.mxu0 0.0
          %588 = vmatpush1.xpose.msra.mxu0 0.0
          %589 = vmatprep.subr.mxu0 0.0
          %590 = vmatpush1.xpose.msra.mxu0 0.0
          %591 = vmatprep.subr.mxu0 0.0
          %592 = vmatpush1.xpose.msra.mxu0 0.0
          %593 = vmatprep.subr.mxu0 0.0
          %594 = vmatpush1.xpose.msra.mxu0 0.0
          %595 = vmatprep.subr.mxu0 0.0
          %596 = vmatpush1.xpose.msra.mxu0 0.0
          %597 = vmatprep.subr.mxu0 0.0
          %598 = vmatpush1.xpose.msra.mxu0 0.0
          %599 = vmatprep.subr.mxu0 0.0
          %600 = vmatpush1.xpose.msra.mxu0 0.0
          %601 = vmatprep.subr.mxu0 0.0
          %602 = vmatpush1.xpose.msra.mxu0 0.0
          %603 = vmatprep.subr.mxu0 0.0
          %604 = vmatpush1.xpose.msra.mxu0 0.0
          %605 = vmatprep.subr.mxu0 0.0
          %606 = vmatpush1.xpose.msra.mxu0 0.0
          %607 = vmatprep.subr.mxu0 0.0
          %608 = vmatpush1.xpose.msra.mxu0 0.0
          %609 = vmatprep.subr.mxu0 0.0
          %610 = vmatpush1.xpose.msra.mxu0 0.0
          %611 = vmatprep.subr.mxu0 0.0
          %612 = vmatpush1.xpose.msra.mxu0 0.0
          %613 = vmatprep.subr.mxu0 0.0
          %614 = vmatpush1.xpose.msra.mxu0 0.0
          %615 = vmatprep.subr.mxu0 0.0
          %616 = vmatpush1.xpose.msra.mxu0 0.0
          %617 = vmatprep.subr.mxu0 0.0
          %618 = vmatpush1.xpose.msra.mxu0 0.0
          %619 = vmatprep.subr.mxu0 0.0
          %620 = vmatpush1.xpose.msra.mxu0 0.0
          %621 = vmatprep.subr.mxu0 0.0
          %622 = vmatpush1.xpose.msra.mxu0 0.0
          %623 = vmatprep.subr.mxu0 0.0
          %624 = vmatpush1.xpose.msra.mxu0 0.0
          %625 = vmatprep.subr.mxu0 0.0
          %626 = vmatpush1.xpose.msra.mxu0 0.0
          %627 = vmatprep.subr.mxu0 0.0
          %628 = vmatpush1.xpose.msra.mxu0 0.0
          %629 = vmatprep.mubr.f32.mxu0 0.0
          %630 = vmatmul.mubr.f32.gmra.mrb[0].mxu0 %v556
          %v631 = vpop.f32.mrb[0].mxu0
          %v632 = vadd.f32 0.0, %v631
          %v633 = vpop.f32.mrb[0].mxu0
          %634 = vdwg.mxu0
          %vm635 = vcmask 64512
          %636 = vst.msk [vmem:[#allocation7] sm:$0xff] %vm635, %v632
          %v637 = vlaneseq
          %v638 = vshrl.u32 %v637, 7
          %v639 = vsub.s32 0, %v638
          %v640 = vrot.slane %v564, %v639
          %v641 = vmul.f32 %v556, %v640
          %642 = vadd.xlane.f32.xlu0 %v641
          %v643 = vpop.xlane.xlu0 %642
          %vm644 = vcmask 7168
          %645 = vst.msk [vmem:[%s7] sm:$0xff] %vm644, %v643
        $region44: #{_process_device.1} parent=35 // pred_fallthru
          _
        // Predicated region
        $region45: #{_process_device.1} parent=35 // pred_check
          %p646 = pneg %p128
        $region46: #{_process_device.1} parent=35 // pred_check_branch
          %648 = sbr.rel (%p646) target = $region48
        $region47: #{_process_device.1} parent=35 // pred_region
          %s650 = ssub.s32 128, 128
          %651 = vsyncadd [#allocation4], %s650
          %s653 = sshll.u32 [#allocation3], 4
          %s654 = int_to_ptr.vmem [resolvable:$true] %s653
          %656 = dma.vmem_to_hbm [thread:$0]  %s654, 128, %s4, [#allocation4]
        $region48: #{_process_device.1} parent=35 // pred_fallthru
          _
        // Predicated region
        $region49: #{_process_device.1} parent=35 // pred_check
          %p657 = pneg %p149
        $region50: #{_process_device.1} parent=35 // pred_check_branch
          %659 = sbr.rel (%p657) target = $region52
        $region51: #{_process_device.1} parent=35 // pred_region
          %s661 = ssub.s32 16, 16
          %662 = vsyncadd [#allocation6], %s661
          %s664 = sshll.u32 [#allocation5], 4
          %s665 = int_to_ptr.vmem [resolvable:$true] %s664
          %667 = dma.vmem_to_hbm [thread:$0]  %s665, 16, %s5, [#allocation6]
        $region52: #{_process_device.1} parent=35 // pred_fallthru
          _
        // Predicated region
        $region53: #{_process_device.1} parent=35 // pred_check
          %p668 = pneg %p170
        $region54: #{_process_device.1} parent=35 // pred_check_branch
          %670 = sbr.rel (%p668) target = $region56
        $region55: #{_process_device.1} parent=35 // pred_region
          %s672 = ssub.s32 128, 128
          %673 = vsyncadd [#allocation6], %s672
          %s675 = sshll.u32 [#allocation7], 4
          %s676 = int_to_ptr.vmem [resolvable:$true] %s675
          %678 = dma.vmem_to_hbm [thread:$0]  %s676, 128, %s6, [#allocation6]
        $region56: #{_process_device.1} parent=35 // pred_fallthru
          _
        // Predicated region
        $region57: #{_process_device.1} parent=35 // pred_check
          %p679 = pneg %p191
        $region58: #{_process_device.1} parent=35 // pred_check_branch
          %681 = sbr.rel (%p679) target = $region60
        $region59: #{_process_device.1} parent=35 // pred_region
          _
        $region60: #{_process_device.1} parent=35 // pred_fallthru
          _
        // Predicated region
        $region61: #{_process_device.1} parent=35 // pred_check
          %p682 = pneg %p128
        $region62: #{_process_device.1} parent=35 // pred_check_branch
          %684 = sbr.rel (%p682) target = $region64
        $region63: #{_process_device.1} parent=35 // pred_region
          %685 = dma.done [#allocation4], 128
        $region64: #{_process_device.1} parent=35 // pred_fallthru
          _
        // Predicated region
        $region65: #{_process_device.1} parent=35 // pred_check
          %p686 = pneg %p149
        $region66: #{_process_device.1} parent=35 // pred_check_branch
          %688 = sbr.rel (%p686) target = $region68
        $region67: #{_process_device.1} parent=35 // pred_region
          %689 = dma.done [#allocation6], 16
        $region68: #{_process_device.1} parent=35 // pred_fallthru
          _
        // Predicated region
        $region69: #{_process_device.1} parent=35 // pred_check
          %p690 = pneg %p170
        $region70: #{_process_device.1} parent=35 // pred_check_branch
          %692 = sbr.rel (%p690) target = $region72
        $region71: #{_process_device.1} parent=35 // pred_region
          %693 = dma.done [#allocation6], 128
        $region72: #{_process_device.1} parent=35 // pred_fallthru
          _
        // Predicated region
        $region73: #{_process_device.1} parent=35 // pred_check
          %p694 = pneg %p191
        $region74: #{_process_device.1} parent=35 // pred_check_branch
          %696 = sbr.rel (%p694) target = $region76
        $region75: #{_process_device.1} parent=35 // pred_region
          _
        $region76: #{_process_device.1} parent=35 // pred_fallthru
          _
      $region36: #{_process_device.1} parent=5 // pred_fallthru
        _
      %p697 = scmp.le.s32.totalorder 2, %s16
      // Predicated region
      $region77: #{_process_device.1} parent=5 // pred_check
        %p698 = pneg %p697
      $region78: #{_process_device.1} parent=5 // pred_check_branch
        %700 = sbr.rel (%p698) target = $region80
      $region79: #{_process_device.1} parent=5 // pred_region
        %s701 = ssub.s32 %s16, 2
      $region80: #{_process_device.1} parent=5 // pred_fallthru
        _
    $region6: #{_process_device.1} parent=1 // loop_footer
      %s20 = sadd.s32 1, %s16
    $region7: #{_process_device.1} parent=1 // loop_footer_branch
      %15 = sbr.rel target = $region3
    $region8: #{_process_device.1} parent=1 // loop_exit
      _
    %702 = vsyncpa [#allocation4], 1
    %s703 = scalar_lea.sflag [#allocation4], 1
    %704 = vsyncpa %s703, 1
    %705 = vsyncpa [#allocation6], 1

</llo_original>
